<compile_context>
chip_gen: v5e
topology: v5e:2x2
jax: 0.10.0
libtpu: 0.0.40
codegen_flags: <defaults>
</compile_context>

<pallas_src>
import functools

import jax
import jax.numpy as jnp
from jax.experimental import pallas as pl
from jax.experimental.pallas import tpu as pltpu


# ---------------------------------------------------------------------------
# Tiny FC head on a (C, 1) pooled vector.
# C is small, so VPU broadcast-multiply + XLU reduce beats padding the MXU.
# BatchNorm is already folded into (w1t, b1) by the wrapper.
# ---------------------------------------------------------------------------
def _fc_threshold(pooled, w1t_ref, b1_ref, w2_ref, b2_ref):
    C = pooled.shape[0]
    average = jnp.sum(pooled, keepdims=True) * (1.0 / C)                # (1, 1)
    # Linear1 (+ folded eval-mode BN) + ReLU:  h[j] = sum_i W1t[i, j] * p[i] + b1[j]
    h = jnp.sum(w1t_ref[...] * pooled, axis=0, keepdims=True) + b1_ref[...]   # (1, C)
    h = jnp.maximum(h, 0.0)
    # Linear2 + Sigmoid:  h2[o] = sum_i W2[o, i] * h[i] + b2[o]
    h2 = jnp.sum(w2_ref[...] * h, axis=1, keepdims=True) + b2_ref[...]        # (C, 1)
    return average * jax.nn.sigmoid(h2)                                 # (C, 1)


# ---------------------------------------------------------------------------
# Fused single pass: per-batch slab fits in VMEM -> pool + FC + shrink at once.
# ---------------------------------------------------------------------------
def _fused_kernel(x_ref, w1t_ref, b1_ref, w2_ref, b2_ref, o_ref, *, L):
    x = x_ref[0].astype(jnp.float32)                                    # (C, L)
    pooled = jnp.sum(jnp.abs(x), axis=1, keepdims=True) * (1.0 / L)     # (C, 1)
    thr = _fc_threshold(pooled, w1t_ref, b1_ref, w2_ref, b2_ref)        # (C, 1)
    # sign(x) * max(|x| - thr, 0) == x - clip(x, -thr, thr)  (thr >= 0)
    o_ref[0] = (x - jnp.clip(x, -thr, thr)).astype(o_ref.dtype)


# ---------------------------------------------------------------------------
# Two-pass fallback, pass 1: tiled abs-mean over L + FC -> per-(n, c) threshold
# ---------------------------------------------------------------------------
def _pool_fc_kernel(x_ref, w1t_ref, b1_ref, w2_ref, b2_ref, thr_ref, acc_ref,
                    *, L, tile_l, need_mask):
    l = pl.program_id(1)

    @pl.when(l == 0)
    def _():
        acc_ref[...] = jnp.zeros_like(acc_ref)

    x = x_ref[0].astype(jnp.float32)                                    # (C, tile_l)
    xabs = jnp.abs(x)
    if need_mask:  # only emitted when tile_l does not divide L
        col = jax.lax.broadcasted_iota(jnp.int32, x.shape, 1) + l * tile_l
        xabs = jnp.where(col < L, xabs, 0.0)
    acc_ref[...] += jnp.sum(xabs, axis=1, keepdims=True)                # (C, 1)

    @pl.when(l == pl.num_programs(1) - 1)
    def _():
        pooled = acc_ref[...] * (1.0 / L)                               # GAP(|x|)
        thr = _fc_threshold(pooled, w1t_ref, b1_ref, w2_ref, b2_ref)
        thr_ref[0] = thr.astype(thr_ref.dtype)


# ---------------------------------------------------------------------------
# Two-pass fallback, pass 2: elementwise soft-threshold
# ---------------------------------------------------------------------------
def _shrink_kernel(x_ref, thr_ref, o_ref):
    x = x_ref[0].astype(jnp.float32)                                    # (C, tile_l)
    thr = thr_ref[0].astype(jnp.float32)                                # (C, 1)
    o_ref[0] = (x - jnp.clip(x, -thr, thr)).astype(o_ref.dtype)


def _choose_tile_l(C, L, max_tile_bytes=2 * 1024 * 1024):
    """Largest lane-aligned (multiple of 128) L tile whose f32 copy stays under
    ~2 MiB; keeps double-buffered tiles well inside scoped VMEM on
    v5e/v6e/v7x while giving the pipeline many steps to overlap."""
    if L <= 128:
        return int(L)
    by_budget = (max_tile_bytes // max(C * 4, 1)) // 128 * 128
    tile = min(max(by_budget, 128), (L // 128) * 128, 4096)
    return int(tile)


def audio_shrinkage(x, w1, b1, bn_gamma, bn_beta, bn_mean, bn_var, w2, b2,
                    *, eps=1e-5, tile_l=None,
                    fuse_vmem_budget=2 * 1024 * 1024):
    """Forward pass of audio_Shrinkage (gap_size == 1, eval-mode BatchNorm).

    x          : (N, C, L)   NCL, PyTorch Conv1d convention
    w1, w2     : (C, C)      nn.Linear weights (out_features, in_features)
    b1, b2     : (C,)
    bn_*       : (C,)        BatchNorm1d gamma / beta / running_mean / running_var
    returns    : (N, C, L)
    """
    N, C, L = x.shape
    f32 = jnp.float32
    itemsize = jnp.dtype(x.dtype).itemsize

    # ---- fold eval-mode BatchNorm1d into Linear1 (tiny pure-JAX glue) ------
    inv = jnp.asarray(bn_gamma, f32) * jax.lax.rsqrt(jnp.asarray(bn_var, f32) + eps)
    w1_eff = jnp.asarray(w1, f32) * inv[:, None]                        # (C_out, C_in)
    b1_eff = ((jnp.asarray(b1, f32) - jnp.asarray(bn_mean, f32)) * inv
              + jnp.asarray(bn_beta, f32))                              # (C,)
    w1t = w1_eff.T                                                      # (C_in, C_out)
    b1r = b1_eff.reshape(1, C)
    w2m = jnp.asarray(w2, f32)                                          # (C_out, C_in)
    b2c = jnp.asarray(b2, f32).reshape(C, 1)

    param_specs = [
        pl.BlockSpec((C, C), lambda *a: (0, 0)),                        # W1^T (BN folded)
        pl.BlockSpec((1, C), lambda *a: (0, 0)),                        # b1 (BN folded)
        pl.BlockSpec((C, C), lambda *a: (0, 0)),                        # W2
        pl.BlockSpec((C, 1), lambda *a: (0, 0)),                        # b2
    ]

    # ---- fused single-pass path (one HBM read + one write of x) -----------
    slab_f32_bytes = C * L * 4
    if tile_l is None and slab_f32_bytes <= fuse_vmem_budget:
        kernel = functools.partial(_fused_kernel, L=L)
        return pl.pallas_call(
            kernel,
            out_shape=jax.ShapeDtypeStruct((N, C, L), x.dtype),
            grid_spec=pltpu.PrefetchScalarGridSpec(
                num_scalar_prefetch=0,
                grid=(N,),
                in_specs=[pl.BlockSpec((1, C, L), lambda n: (n, 0, 0))] + param_specs,
                out_specs=pl.BlockSpec((1, C, L), lambda n: (n, 0, 0)),
            ),
            compiler_params=pltpu.CompilerParams(
                dimension_semantics=("parallel",),
                vmem_limit_bytes=32 * 1024 * 1024),
            cost_estimate=pl.CostEstimate(
                flops=int(6 * N * C * L + 4 * N * C * C + 10 * N * C),
                transcendentals=int(N * C),
                bytes_accessed=int(2 * N * C * L * itemsize + 2 * C * C * 4
                                   + 2 * C * 4)),
        )(x, w1t, b1r, w2m, b2c)

    # ---- two tiled passes (large L: slab does not fit in VMEM) ------------
    if tile_l is None:
        tile_l = _choose_tile_l(C, L)
    n_l = pl.cdiv(L, tile_l)
    need_mask = (L % tile_l) != 0

    pool_kernel = functools.partial(_pool_fc_kernel, L=L, tile_l=tile_l,
                                    need_mask=need_mask)
    thr = pl.pallas_call(
        pool_kernel,
        out_shape=jax.ShapeDtypeStruct((N, C, 1), f32),
        grid_spec=pltpu.PrefetchScalarGridSpec(
            num_scalar_prefetch=0,
            grid=(N, n_l),
            in_specs=[pl.BlockSpec((1, C, tile_l), lambda n, l: (n, 0, l))]
                     + param_specs,
            out_specs=pl.BlockSpec((1, C, 1), lambda n, l: (n, 0, 0)),
            scratch_shapes=[pltpu.VMEM((C, 1), f32)],
        ),
        compiler_params=pltpu.CompilerParams(
            dimension_semantics=("parallel", "arbitrary"),
            vmem_limit_bytes=32 * 1024 * 1024),
        cost_estimate=pl.CostEstimate(
            flops=int(3 * N * C * L + 4 * N * C * C + 10 * N * C),
            transcendentals=int(N * C),
            bytes_accessed=int(N * C * L * itemsize + 2 * C * C * 4
                               + 2 * C * 4 + N * C * 4)),
    )(x, w1t, b1r, w2m, b2c)

    out = pl.pallas_call(
        _shrink_kernel,
        out_shape=jax.ShapeDtypeStruct((N, C, L), x.dtype),
        grid_spec=pltpu.PrefetchScalarGridSpec(
            num_scalar_prefetch=0,
            grid=(N, n_l),
            in_specs=[
                pl.BlockSpec((1, C, tile_l), lambda n, l: (n, 0, l)),   # x
                pl.BlockSpec((1, C, 1), lambda n, l: (n, 0, 0)),        # thr
            ],
            out_specs=pl.BlockSpec((1, C, tile_l), lambda n, l: (n, 0, l)),
        ),
        compiler_params=pltpu.CompilerParams(
            dimension_semantics=("parallel", "parallel"),
            vmem_limit_bytes=32 * 1024 * 1024),
        cost_estimate=pl.CostEstimate(
            flops=int(3 * N * C * L),
            transcendentals=0,
            bytes_accessed=int(2 * N * C * L * itemsize + N * C * 4)),
    )(x, thr)
    return out


# ---------------------------------------------------------------------------
# Pure-JAX reference matching audio_Shrinkage.forward (gap_size=1, eval BN)
# ---------------------------------------------------------------------------
def _reference(x, w1, b1, bn_gamma, bn_beta, bn_mean, bn_var, w2, b2, eps=1e-5):
    x = x.astype(jnp.float32)
    x_abs = jnp.abs(x)
    pooled = jnp.mean(x_abs, axis=2)                                    # (N, C)
    average = jnp.mean(pooled, axis=1, keepdims=True)                   # (N, 1)
    h = pooled @ w1.T + b1
    h = (h - bn_mean) / jnp.sqrt(bn_var + eps) * bn_gamma + bn_beta
    h = jnp.maximum(h, 0.0)
    h = h @ w2.T + b2
    scale = jax.nn.sigmoid(h)
    thr = (average * scale)[:, :, None]                                 # (N, C, 1)
    n_sub = jnp.maximum(x_abs - thr, 0.0)
    return jnp.sign(x) * n_sub


if __name__ == "__main__":
    # Small deterministic shapes: batch=2, channels=8, length=384.
    N, C, L = 2, 8, 384
    key = jax.random.PRNGKey(0)
    ks = jax.random.split(key, 9)

    x = jax.random.normal(ks[0], (N, C, L), jnp.float32)
    w1 = jax.random.normal(ks[1], (C, C), jnp.float32) * 0.2
    b1 = jax.random.normal(ks[2], (C,), jnp.float32) * 0.1
    w2 = jax.random.normal(ks[3], (C, C), jnp.float32) * 0.2
    b2 = jax.random.normal(ks[4], (C,), jnp.float32) * 0.1
    bn_gamma = 1.0 + 0.1 * jax.random.normal(ks[5], (C,), jnp.float32)
    bn_beta = 0.1 * jax.random.normal(ks[6], (C,), jnp.float32)
    bn_mean = 0.1 * jax.random.normal(ks[7], (C,), jnp.float32)
    bn_var = jnp.full((C,), 0.9, jnp.float32)

    ref = _reference(x, w1, b1, bn_gamma, bn_beta, bn_mean, bn_var, w2, b2)

    # 1) fused single-pass path (default for small per-batch slabs)
    out_fused = jax.block_until_ready(
        audio_shrinkage(x, w1, b1, bn_gamma, bn_beta, bn_mean, bn_var, w2, b2))
    assert out_fused.shape == ref.shape, (out_fused.shape, ref.shape)
    assert jnp.allclose(out_fused, ref, atol=1e-4, rtol=1e-4), float(
        jnp.max(jnp.abs(out_fused - ref)))

    # 2) forced two-pass tiled path (exact L division -> mask elided)
    out_tiled = jax.block_until_ready(
        audio_shrinkage(x, w1, b1, bn_gamma, bn_beta, bn_mean, bn_var, w2, b2,
                        tile_l=128))
    assert jnp.allclose(out_tiled, ref, atol=1e-4, rtol=1e-4), float(
        jnp.max(jnp.abs(out_tiled - ref)))

    # 3) two-pass path with a ragged last tile (L not a multiple of tile_l)
    L2 = 200
    x2 = jax.random.normal(ks[8], (N, C, L2), jnp.float32)
    out_ragged = jax.block_until_ready(
        audio_shrinkage(x2, w1, b1, bn_gamma, bn_beta, bn_mean, bn_var, w2, b2,
                        tile_l=128))
    ref2 = _reference(x2, w1, b1, bn_gamma, bn_beta, bn_mean, bn_var, w2, b2)
    assert jnp.allclose(out_ragged, ref2, atol=1e-4, rtol=1e-4), float(
        jnp.max(jnp.abs(out_ragged - ref2)))

    print("KERNEL_OK")
</pallas_src>

<mosaic_0001>
module attributes {stable_mosaic.version = 11 : i64} {
  func.func @_fused_kernel(%arg0: i32, %arg1: memref<1x8x384xf32, #tpu.memory_space<vmem>>, %arg2: memref<8x8xf32, #tpu.memory_space<vmem>>, %arg3: memref<1x8xf32, #tpu.memory_space<vmem>>, %arg4: memref<8x8xf32, #tpu.memory_space<vmem>>, %arg5: memref<8x1xf32, #tpu.memory_space<vmem>>, %arg6: memref<1x8x384xf32, #tpu.memory_space<vmem>>) attributes {dimension_semantics = [#tpu.dimension_semantics<parallel>], iteration_bounds = array<i64: 2>, scalar_prefetch = 0 : i64, scratch_operands = 0 : i64, tpu.core_type = #tpu.core_type<tc>, window_params = [{transform_indices = @transform_0, window_bounds = array<i64: 1, 8, 384>}, {pipeline_mode = #tpu.pipeline_mode<synchronous>, transform_indices = @transform_1, window_bounds = array<i64: 8, 8>}, {pipeline_mode = #tpu.pipeline_mode<synchronous>, transform_indices = @transform_2, window_bounds = array<i64: 1, 8>}, {pipeline_mode = #tpu.pipeline_mode<synchronous>, transform_indices = @transform_3, window_bounds = array<i64: 8, 8>}, {pipeline_mode = #tpu.pipeline_mode<synchronous>, transform_indices = @transform_4, window_bounds = array<i64: 8, 1>}, {transform_indices = @transform_5, window_bounds = array<i64: 1, 8, 384>}]} {
    %c0 = arith.constant 0 : index
    %c0_0 = arith.constant 0 : index
    %c0_1 = arith.constant 0 : index
    %0 = vector.load %arg1[%c0, %c0_0, %c0_1] : memref<1x8x384xf32, #tpu.memory_space<vmem>>, vector<1x8x384xf32>
    %1 = vector.shape_cast %0 : vector<1x8x384xf32> to vector<8x384xf32>
    %2 = math.absf %1 : vector<8x384xf32>
    %cst = arith.constant dense<0.000000e+00> : vector<8xf32>
    %3 = vector.multi_reduction <add>, %2, %cst [1] : vector<8x384xf32> to vector<8xf32>
    %4 = vector.shape_cast %3 : vector<8xf32> to vector<8x1xf32>
    %cst_2 = arith.constant 0.00260416674 : f32
    %5 = vector.broadcast %cst_2 : f32 to vector<8x1xf32>
    %6 = arith.mulf %4, %5 : vector<8x1xf32>
    %7 = vector.shape_cast %6 : vector<8x1xf32> to vector<1x8x1xf32>
    %cst_3 = arith.constant dense<0.000000e+00> : vector<1xf32>
    %8 = vector.multi_reduction <add>, %7, %cst_3 [1, 2] : vector<1x8x1xf32> to vector<1xf32>
    %9 = vector.shape_cast %8 : vector<1xf32> to vector<1x1x1xf32>
    %10 = vector.extract %9[0, 0, 0] : f32 from vector<1x1x1xf32>
    %11 = vector.broadcast %10 : f32 to vector<1x1xf32>
    %cst_4 = arith.constant 1.250000e-01 : f32
    %12 = vector.broadcast %cst_4 : f32 to vector<1x1xf32>
    %13 = arith.mulf %11, %12 : vector<1x1xf32>
    %c0_5 = arith.constant 0 : index
    %c0_6 = arith.constant 0 : index
    %14 = vector.load %arg2[%c0_5, %c0_6] : memref<8x8xf32, #tpu.memory_space<vmem>>, vector<8x8xf32>
    %15 = vector.broadcast %6 : vector<8x1xf32> to vector<8x8xf32>
    %16 = arith.mulf %14, %15 : vector<8x8xf32>
    %cst_7 = arith.constant dense<0.000000e+00> : vector<8xf32>
    %17 = vector.multi_reduction <add>, %16, %cst_7 [0] : vector<8x8xf32> to vector<8xf32>
    %18 = vector.shape_cast %17 : vector<8xf32> to vector<1x8xf32>
    %c0_8 = arith.constant 0 : index
    %c0_9 = arith.constant 0 : index
    %19 = vector.load %arg3[%c0_8, %c0_9] : memref<1x8xf32, #tpu.memory_space<vmem>>, vector<1x8xf32>
    %20 = arith.addf %18, %19 : vector<1x8xf32>
    %cst_10 = arith.constant 0.000000e+00 : f32
    %21 = vector.broadcast %cst_10 : f32 to vector<1x8xf32>
    %22 = arith.maximumf %20, %21 : vector<1x8xf32>
    %c0_11 = arith.constant 0 : index
    %c0_12 = arith.constant 0 : index
    %23 = vector.load %arg4[%c0_11, %c0_12] : memref<8x8xf32, #tpu.memory_space<vmem>>, vector<8x8xf32>
    %24 = vector.broadcast %22 : vector<1x8xf32> to vector<8x8xf32>
    %25 = arith.mulf %23, %24 : vector<8x8xf32>
    %cst_13 = arith.constant dense<0.000000e+00> : vector<8xf32>
    %26 = vector.multi_reduction <add>, %25, %cst_13 [1] : vector<8x8xf32> to vector<8xf32>
    %27 = vector.shape_cast %26 : vector<8xf32> to vector<8x1xf32>
    %c0_14 = arith.constant 0 : index
    %c0_15 = arith.constant 0 : index
    %28 = vector.load %arg5[%c0_14, %c0_15] : memref<8x1xf32, #tpu.memory_space<vmem>>, vector<8x1xf32>
    %29 = arith.addf %27, %28 : vector<8x1xf32>
    %30 = arith.negf %29 : vector<8x1xf32>
    %31 = math.exp %30 : vector<8x1xf32>
    %cst_16 = arith.constant 1.000000e+00 : f32
    %32 = vector.broadcast %cst_16 : f32 to vector<8x1xf32>
    %33 = arith.addf %32, %31 : vector<8x1xf32>
    %34 = arith.divf %32, %33 : vector<8x1xf32>
    %35 = vector.broadcast %13 : vector<1x1xf32> to vector<8x1xf32>
    %36 = arith.mulf %35, %34 : vector<8x1xf32>
    %cst_17 = arith.constant 0.000000e+00 : f32
    %37 = vector.broadcast %cst_17 : f32 to vector<8x1xf32>
    %38 = arith.subf %37, %36 : vector<8x1xf32>
    %39 = vector.broadcast %38 : vector<8x1xf32> to vector<8x384xf32>
    %40 = arith.maximumf %39, %1 : vector<8x384xf32>
    %41 = vector.broadcast %36 : vector<8x1xf32> to vector<8x384xf32>
    %42 = arith.minimumf %41, %40 : vector<8x384xf32>
    %43 = arith.subf %1, %42 : vector<8x384xf32>
    %c0_18 = arith.constant 0 : index
    %c0_19 = arith.constant 0 : index
    %c0_20 = arith.constant 0 : index
    %44 = vector.load %arg6[%c0_18, %c0_19, %c0_20] : memref<1x8x384xf32, #tpu.memory_space<vmem>>, vector<1x8x384xf32>
    %45 = vector.shape_cast %44 : vector<1x8x384xf32> to vector<8x384xf32>
    %46 = vector.shape_cast %43 : vector<8x384xf32> to vector<1x8x384xf32>
    tpu.vector_store %arg6[%c0_18, %c0_19, %c0_20], %46 {strides = array<i32>} : memref<1x8x384xf32, #tpu.memory_space<vmem>>, vector<1x8x384xf32>,
    return
  }
  func.func @transform_0(%arg0: i32) -> (i32, i32, i32) {
    %c0_i32 = arith.constant 0 : i32
    %c0_i32_0 = arith.constant 0 : i32
    %c0_i32_1 = arith.constant 0 : i32
    return %arg0, %c0_i32, %c0_i32_0 : i32, i32, i32
  }
  func.func @transform_1(%arg0: i32) -> (i32, i32) {
    %c0_i32 = arith.constant 0 : i32
    %c0_i32_0 = arith.constant 0 : i32
    %c0_i32_1 = arith.constant 0 : i32
    return %c0_i32, %c0_i32_0 : i32, i32
  }
  func.func @transform_2(%arg0: i32) -> (i32, i32) {
    %c0_i32 = arith.constant 0 : i32
    %c0_i32_0 = arith.constant 0 : i32
    %c0_i32_1 = arith.constant 0 : i32
    return %c0_i32, %c0_i32_0 : i32, i32
  }
  func.func @transform_3(%arg0: i32) -> (i32, i32) {
    %c0_i32 = arith.constant 0 : i32
    %c0_i32_0 = arith.constant 0 : i32
    %c0_i32_1 = arith.constant 0 : i32
    return %c0_i32, %c0_i32_0 : i32, i32
  }
  func.func @transform_4(%arg0: i32) -> (i32, i32) {
    %c0_i32 = arith.constant 0 : i32
    %c0_i32_0 = arith.constant 0 : i32
    %c0_i32_1 = arith.constant 0 : i32
    return %c0_i32, %c0_i32_0 : i32, i32
  }
  func.func @transform_5(%arg0: i32) -> (i32, i32, i32) {
    %c0_i32 = arith.constant 0 : i32
    %c0_i32_0 = arith.constant 0 : i32
    %c0_i32_1 = arith.constant 0 : i32
    return %arg0, %c0_i32, %c0_i32_0 : i32, i32, i32
  }
}

</mosaic_0001>

<llo_original>
// kernel: tpu_custom_call.1
$region0: #{tpu_custom_call.1}
  #allocation0 [shape = 'u32[]', space=smem, size = 0x4, offset = 0x4, fixed_abs, tag = 'smem constant byte address 0x4 - core index']
  #allocation1 [shape = 'u32[72,128]{1,0:T(1,128)}', space=vmem, size = 0x9000, scoped, tag = 'internal scratch']
  %s0 = inlined_call_operand.hbm [shape: f32[2,8,384], index: 0, kind: input, shape index: {}]
  %s1 = inlined_call_operand.vmem [shape: f32[8,8], index: 1, kind: input, shape index: {}]
  %s2 = inlined_call_operand.vmem [shape: f32[1,8], index: 2, kind: input, shape index: {}]
  %s3 = inlined_call_operand.hbm [shape: f32[8,8], index: 3, kind: input, shape index: {}]
  %s4 = inlined_call_operand.vmem [shape: f32[8,1], index: 4, kind: input, shape index: {}]
  %s5 = inlined_call_operand.hbm [shape: f32[2,8,384], index: 5, kind: output, shape index: {}]
  %s6 = sld [smem:[#allocation0]]
  $region61: #{tpu_custom_call.1} parent=0
    _
  %s8 = ssub.s32 1, %s6
  %s9 = scalar_select 0, %s8, %s6
  $region1: #{tpu_custom_call.1} parent=0
    #allocation2 [shape = 'u8[24576]{0}', space=vmem, size = 0x6000, scoped, tag = 'input window, operand 0']
    #allocation3 [shape = 's32[2]{0}', space=sflag, size = 0x8, scoped, tag = 'scoped memory for tpu_custom_call.1']
    #allocation4 [shape = 's32[2]{0}', space=sflag, size = 0x8, scoped, tag = 'scoped memory for tpu_custom_call.1']
    #allocation5 [shape = 'u8[4096]{0}', space=vmem, size = 0x1000, scoped, tag = 'input window, operand 3, single buffered']
    #allocation6 [shape = 's32[1]{0}', space=sflag, size = 0x4, scoped, tag = 'scoped memory for tpu_custom_call.1']
    #allocation7 [shape = 'u8[24576]{0}', space=vmem, size = 0x6000, scoped, tag = 'output window, operand 0']
    %10 = vsyncpa [#allocation3], 0
    %s11 = scalar_lea.sflag [#allocation3], 1
    %12 = vsyncpa %s11, 0
    %13 = vsyncpa [#allocation6], 0
    %14 = vsyncpa [#allocation4], 0
    %s15 = scalar_lea.sflag [#allocation4], 1
    %16 = vsyncpa %s15, 0
    loop: start=0, step=1, limit=4
    $region2: #{tpu_custom_call.1} parent=1 // loop_pre_header
      _
    $region3: #{tpu_custom_call.1} parent=1 // loop_header
      %s18 = sphi 0, %s22
      %p19 = scmp.ge.s32.totalorder %s18, 4
      %s28 = sphi 0, %s30
      %s31 = sphi 0, %s28
      %s32 = sphi 0, %s31
      %s48 = sphi 0, %s32
      %s52 = sphi 0, %s52
      %s54 = sphi 0, %s52
      %s55 = sphi 0, %s54
      %s69 = sphi 0, %s55
      %s73 = sphi 0, %s73
      %s75 = sphi 0, %s73
      %s76 = sphi 0, %s75
      %s90 = sphi 0, %s76
      %s94 = sphi 0, %s94
      %s96 = sphi 0, %s94
      %s97 = sphi 0, %s96
      %s111 = sphi 0, %s97
      %s115 = sphi 0, %s115
      %s117 = sphi 0, %s115
      %s118 = sphi 0, %s117
      %s132 = sphi 0, %s118
      %s138 = sphi 0, %s140
      %s141 = sphi 0, %s138
      %s142 = sphi 0, %s141
      %s158 = sphi 0, %s142
    $region4: #{tpu_custom_call.1} parent=1 // loop_header_branch
      %21 = sbr.rel (%p19) target = $region8
    $region5: #{tpu_custom_call.1} parent=1 // loop_body
      %s23 = ssub.s32 %s18, 1
      %s24 = ssub.s32 %s18, 2
      %s25 = sadd.s32 %s18, 1
      %s26 = ssub.s32 %s18, %s25
      %p27 = scmp.eq.s32.totalorder %s26, 0
      %s29 = sadd.s32 %s28, 1
      %s30 = scalar_select %p27, %s28, %s29
      %p33 = pneg %p27
      %p34 = scmp.eq.s32.totalorder %s18, 1
      %p35 = por %p33, %p34
      %p36 = scmp.ne.s32.totalorder %s28, %s31
      %p37 = scmp.eq.s32.totalorder %s18, 0
      %p38 = por %p36, %p37
      %p39 = scmp.ne.s32.totalorder %s28, %s31
      %p40 = scmp.eq.s32.totalorder %s23, 1
      %p41 = por %p39, %p40
      %p42 = scmp.ne.s32.totalorder %s31, %s32
      %p43 = scmp.eq.s32.totalorder %s23, 0
      %p44 = por %p42, %p43
      %p45 = scmp.ne.s32.totalorder %s31, %s32
      %p46 = scmp.eq.s32.totalorder %s24, 1
      %p47 = por %p45, %p46
      %p49 = scmp.ne.s32.totalorder %s32, %s48
      %p50 = scmp.eq.s32.totalorder %s24, 0
      %p51 = por %p49, %p50
      %s53 = sadd.s32 %s52, 1
      %p56 = scmp.eq.s32.totalorder %s18, 1
      %p57 = scmp.ne.s32.totalorder %s52, %s54
      %p58 = scmp.eq.s32.totalorder %s18, 0
      %p59 = por %p57, %p58
      %p60 = scmp.ne.s32.totalorder %s52, %s54
      %p61 = scmp.eq.s32.totalorder %s23, 1
      %p62 = por %p60, %p61
      %p63 = scmp.ne.s32.totalorder %s54, %s55
      %p64 = scmp.eq.s32.totalorder %s23, 0
      %p65 = por %p63, %p64
      %p66 = scmp.ne.s32.totalorder %s54, %s55
      %p67 = scmp.eq.s32.totalorder %s24, 1
      %p68 = por %p66, %p67
      %p70 = scmp.ne.s32.totalorder %s55, %s69
      %p71 = scmp.eq.s32.totalorder %s24, 0
      %p72 = por %p70, %p71
      %s74 = sadd.s32 %s73, 1
      %p77 = scmp.eq.s32.totalorder %s18, 1
      %p78 = scmp.ne.s32.totalorder %s73, %s75
      %p79 = scmp.eq.s32.totalorder %s18, 0
      %p80 = por %p78, %p79
      %p81 = scmp.ne.s32.totalorder %s73, %s75
      %p82 = scmp.eq.s32.totalorder %s23, 1
      %p83 = por %p81, %p82
      %p84 = scmp.ne.s32.totalorder %s75, %s76
      %p85 = scmp.eq.s32.totalorder %s23, 0
      %p86 = por %p84, %p85
      %p87 = scmp.ne.s32.totalorder %s75, %s76
      %p88 = scmp.eq.s32.totalorder %s24, 1
      %p89 = por %p87, %p88
      %p91 = scmp.ne.s32.totalorder %s76, %s90
      %p92 = scmp.eq.s32.totalorder %s24, 0
      %p93 = por %p91, %p92
      %s95 = sadd.s32 %s94, 1
      %p98 = scmp.eq.s32.totalorder %s18, 1
      %p99 = scmp.ne.s32.totalorder %s94, %s96
      %p100 = scmp.eq.s32.totalorder %s18, 0
      %p101 = por %p99, %p100
      %p102 = scmp.ne.s32.totalorder %s94, %s96
      %p103 = scmp.eq.s32.totalorder %s23, 1
      %p104 = por %p102, %p103
      %p105 = scmp.ne.s32.totalorder %s96, %s97
      %p106 = scmp.eq.s32.totalorder %s23, 0
      %p107 = por %p105, %p106
      %p108 = scmp.ne.s32.totalorder %s96, %s97
      %p109 = scmp.eq.s32.totalorder %s24, 1
      %p110 = por %p108, %p109
      %p112 = scmp.ne.s32.totalorder %s97, %s111
      %p113 = scmp.eq.s32.totalorder %s24, 0
      %p114 = por %p112, %p113
      %s116 = sadd.s32 %s115, 1
      %p119 = scmp.eq.s32.totalorder %s18, 1
      %p120 = scmp.ne.s32.totalorder %s115, %s117
      %p121 = scmp.eq.s32.totalorder %s18, 0
      %p122 = por %p120, %p121
      %p123 = scmp.ne.s32.totalorder %s115, %s117
      %p124 = scmp.eq.s32.totalorder %s23, 1
      %p125 = por %p123, %p124
      %p126 = scmp.ne.s32.totalorder %s117, %s118
      %p127 = scmp.eq.s32.totalorder %s23, 0
      %p128 = por %p126, %p127
      %p129 = scmp.ne.s32.totalorder %s117, %s118
      %p130 = scmp.eq.s32.totalorder %s24, 1
      %p131 = por %p129, %p130
      %p133 = scmp.ne.s32.totalorder %s118, %s132
      %p134 = scmp.eq.s32.totalorder %s24, 0
      %p135 = por %p133, %p134
      %s136 = ssub.s32 %s18, %s25
      %p137 = scmp.eq.s32.totalorder %s136, 0
      %s139 = sadd.s32 %s138, 1
      %s140 = scalar_select %p137, %s138, %s139
      %p143 = pneg %p137
      %p144 = scmp.eq.s32.totalorder %s18, 1
      %p145 = por %p143, %p144
      %p146 = scmp.ne.s32.totalorder %s138, %s141
      %p147 = scmp.eq.s32.totalorder %s18, 0
      %p148 = por %p146, %p147
      %p149 = scmp.ne.s32.totalorder %s138, %s141
      %p150 = scmp.eq.s32.totalorder %s23, 1
      %p151 = por %p149, %p150
      %p152 = scmp.ne.s32.totalorder %s141, %s142
      %p153 = scmp.eq.s32.totalorder %s23, 0
      %p154 = por %p152, %p153
      %p155 = scmp.ne.s32.totalorder %s141, %s142
      %p156 = scmp.eq.s32.totalorder %s24, 1
      %p157 = por %p155, %p156
      %p159 = scmp.ne.s32.totalorder %s142, %s158
      %p160 = scmp.eq.s32.totalorder %s24, 0
      %p161 = por %p159, %p160
      %p162 = scmp.le.s32.totalorder 1, %s18
      %p163 = scmp.lt.s32.totalorder %s18, 3
      %p164 = pnand %p162, %p163
      %p165 = pneg %p164
      // Predicated region
      $region9: #{tpu_custom_call.1} parent=5 // pred_check
        _
      $region10: #{tpu_custom_call.1} parent=5 // pred_check_branch
        %167 = sbr.rel (%p164) target = $region12
      $region11: #{tpu_custom_call.1} parent=5 // pred_region
        %s168 = ssub.s32 %s18, 1
        // Predicated region
        $region13: #{tpu_custom_call.1} parent=11 // pred_check
          %p169 = pneg %p65
        $region14: #{tpu_custom_call.1} parent=11 // pred_check_branch
          %171 = sbr.rel (%p169) target = $region16
        $region15: #{tpu_custom_call.1} parent=11 // pred_region
          _
        $region16: #{tpu_custom_call.1} parent=11 // pred_fallthru
          _
        // Predicated region
        $region17: #{tpu_custom_call.1} parent=11 // pred_check
          %p172 = pneg %p86
        $region18: #{tpu_custom_call.1} parent=11 // pred_check_branch
          %174 = sbr.rel (%p172) target = $region20
        $region19: #{tpu_custom_call.1} parent=11 // pred_region
          _
        $region20: #{tpu_custom_call.1} parent=11 // pred_fallthru
          _
        // Predicated region
        $region21: #{tpu_custom_call.1} parent=11 // pred_check
          %p175 = pneg %p107
        $region22: #{tpu_custom_call.1} parent=11 // pred_check_branch
          %177 = sbr.rel (%p175) target = $region24
        $region23: #{tpu_custom_call.1} parent=11 // pred_region
          %179 = vsyncadd [#allocation6], 0
          %s181 = sshll.u32 %s3, 4
          %s182 = int_to_ptr.hbm [resolvable:$true] %s181
          %s183 = sshll.u32 [#allocation5], 4
          %s184 = int_to_ptr.vmem [resolvable:$true] %s183
          %186 = dma.hbm_to_vmem [thread:$0]  %s182, 128, %s184, [#allocation6]
        $region24: #{tpu_custom_call.1} parent=11 // pred_fallthru
          _
        // Predicated region
        $region25: #{tpu_custom_call.1} parent=11 // pred_check
          %p187 = pneg %p128
        $region26: #{tpu_custom_call.1} parent=11 // pred_check_branch
          %189 = sbr.rel (%p187) target = $region28
        $region27: #{tpu_custom_call.1} parent=11 // pred_region
          _
        $region28: #{tpu_custom_call.1} parent=11 // pred_fallthru
          _
      $region12: #{tpu_custom_call.1} parent=5 // pred_fallthru
        _
      %p190 = scmp.lt.s32.totalorder %s18, 2
      // Predicated region
      $region29: #{tpu_custom_call.1} parent=5 // pred_check
        %p191 = pneg %p190
      $region30: #{tpu_custom_call.1} parent=5 // pred_check_branch
        %193 = sbr.rel (%p191) target = $region32
      $region31: #{tpu_custom_call.1} parent=5 // pred_region
        // Predicated region
        $region33: #{tpu_custom_call.1} parent=31 // pred_check
          %p194 = pneg %p38
        $region34: #{tpu_custom_call.1} parent=31 // pred_check_branch
          %196 = sbr.rel (%p194) target = $region36
        $region35: #{tpu_custom_call.1} parent=31 // pred_region
          %s197 = sand.u32 %s28, 1
          %s198 = scalar_lea.sflag [#allocation3], %s197
          %s199 = sand.u32 %s28, 1
          %s200 = smul.addr %s199, 24
          %s201 = scalar_lea.vmem [#allocation2], %s200
          %203 = vsyncadd %s198, 0
          %s204 = smul.addr %s18, 3
          %s205 = smul.addr %s204, 8
          %s206 = scalar_lea.hbm %s0, %s205
          %s208 = sshll.u32 %s206, 4
          %s209 = int_to_ptr.hbm [resolvable:$true] %s208
          %s210 = sshll.u32 %s201, 4
          %s211 = int_to_ptr.vmem [resolvable:$true] %s210
          %213 = dma.hbm_to_vmem [thread:$0]  %s209, 384, %s211, %s198
        $region36: #{tpu_custom_call.1} parent=31 // pred_fallthru
          _
      $region32: #{tpu_custom_call.1} parent=5 // pred_fallthru
        _
      %p214 = scmp.le.s32.totalorder 1, %s18
      %p215 = scmp.lt.s32.totalorder %s18, 3
      %p216 = pnand %p214, %p215
      %p217 = pneg %p216
      // Predicated region
      $region37: #{tpu_custom_call.1} parent=5 // pred_check
        _
      $region38: #{tpu_custom_call.1} parent=5 // pred_check_branch
        %219 = sbr.rel (%p216) target = $region40
      $region39: #{tpu_custom_call.1} parent=5 // pred_region
        %s220 = ssub.s32 %s18, 1
        %s221 = sand.u32 %s31, 1
        %s222 = scalar_lea.sflag [#allocation3], %s221
        %s223 = sand.u32 %s31, 1
        %s224 = smul.addr %s223, 24
        %s225 = scalar_lea.vmem [#allocation2], %s224
        // Predicated region
        $region41: #{tpu_custom_call.1} parent=39 // pred_check
          %p226 = pneg %p44
        $region42: #{tpu_custom_call.1} parent=39 // pred_check_branch
          %228 = sbr.rel (%p226) target = $region44
        $region43: #{tpu_custom_call.1} parent=39 // pred_region
          %230 = dma.done %s222, 384
        $region44: #{tpu_custom_call.1} parent=39 // pred_fallthru
          _
        // Predicated region
        $region45: #{tpu_custom_call.1} parent=39 // pred_check
          %p231 = pneg %p107
        $region46: #{tpu_custom_call.1} parent=39 // pred_check_branch
          %233 = sbr.rel (%p231) target = $region48
        $region47: #{tpu_custom_call.1} parent=39 // pred_region
          %235 = dma.done [#allocation6], 128
        $region48: #{tpu_custom_call.1} parent=39 // pred_fallthru
          _
        %s236 = sand.u32 %s31, 1
        %s237 = scalar_lea.sflag [#allocation3], %s236
        %s238 = sand.u32 %s31, 1
        %s239 = smul.addr %s238, 24
        %s240 = scalar_lea.vmem [#allocation2], %s239
        %p241 = pneg %p44
        %p242 = pneg %p41
        %p243 = pneg %p65
        %p244 = pneg %p62
        %p245 = pneg %p86
        %p246 = pneg %p83
        %p247 = pneg %p107
        %p248 = pneg %p104
        %p249 = pneg %p128
        %p250 = pneg %p125
        %p251 = pneg %p154
        %p252 = pneg %p151
        %s253 = sand.u32 %s141, 1
        %s254 = scalar_lea.sflag [#allocation4], %s253
        %s255 = sand.u32 %s141, 1
        %s256 = smul.addr %s255, 24
        %s257 = scalar_lea.vmem [#allocation7], %s256
        %v258 = vld [vmem:[%s225] sm:$0xff]
        %v259 = vld [vmem:[%s225 + $0x8] sm:$0xff]
        %v260 = vld [vmem:[%s225 + $0x10] sm:$0xff]
        %v261 = vand.u32 2147483647, %v258
        %v262 = vand.u32 2147483647, %v259
        %v263 = vand.u32 2147483647, %v260
        %v264 = vadd.f32 %v261, %v262
        %v265 = vadd.f32 %v264, %v263
        %266 = vadd.xlane.f32.xlu0 %v265
        %v267 = vpop.xlane.xlu0 %266
        %v268 = vmul.f32 %v267, 0.0026041667
        %vm269 = vcmask 7168
        %v270 = vsel %vm269, %v268, 0.0
        %271 = vadd.xlane.f32.xlu0 %v270
        %v272 = vpop.xlane.xlu0 %271
        %v273 = vrot.slane %v272, 4
        %v274 = vadd.f32 %v272, %v273
        %v275 = vrot.slane %v274, 2
        %v276 = vadd.f32 %v274, %v275
        %v277 = vrot.slane %v276, 1
        %v278 = vadd.f32 %v276, %v277
        %s279 = vtos %v278
        %v280 = vstv %s279
        %v281 = vmul.f32 %v280, 0.125
        %v282 = vld [vmem:[%s1] sm:$0xff]
        %v283 = vmul.f32 %v282, %v268
        %vm284 = vcmask 64512
        %v285 = vsel %vm284, %v283, 0.0
        %v286 = vrot.slane %v285, 4
        %v287 = vadd.f32 %v285, %v286
        %v288 = vrot.slane %v287, 2
        %v289 = vadd.f32 %v287, %v288
        %v290 = vrot.slane %v289, 1
        %v291 = vadd.f32 %v289, %v290
        %v292 = vld [vmem:[%s2] sm:$0x1]
        %v293 = vadd.f32 %v291, %v292
        %v294 = vmax.f32 %v293, 0.0
        %v295 = vld [vmem:[#allocation5] sm:$0xff]
        %v296 = vperm.slane %v294, 0
        %v297 = vmul.f32 %v295, %v296
        %v298 = vsel %vm284, %v297, 0.0
        %299 = vadd.xlane.f32.xlu0 %v298
        %v300 = vpop.xlane.xlu0 %299
        %v301 = vld [vmem:[%s4] sm:$0xff]
        %v302 = vadd.f32 %v300, %v301
        %v303 = vxor.u32 %v302, 2147483648
        %v304 = vmul.f32 %v303, 1.442695
        %v305 = vpow.pop %v304
        %v306 = vadd.f32 %v305, 1.0
        %v307 = vrcp.pop %v306
        %v308 = vmul.f32 %v306, %v307
        %v309 = vsub.f32 1.0, %v308
        %v310 = vmul.f32 %v307, %v309
        %v311 = vadd.f32 %v307, %v310
        %vm312 = vweird.f32 %v306
        %vm313 = vweird.f32 %v307
        %vm314 = vmor %vm312, %vm313
        %v315 = vsel %vm314, %v307, %v311
        %v316 = vand.u32 2147483647, %v306
        %vm317 = vcmp.eq.f32.partialorder %v316, 8.507059e+37
        %v318 = vand.u32 %v306, 2147483648
        %v319 = vor.u32 1.1754944e-38, %v318
        %v320 = vsel %vm317, %v319, %v315
        %v321 = vmul.f32 1.0, %v320
        %v322 = vmul.f32 %v281, %v321
        %v323 = vsub.f32 0.0, %v322
        %325 = vset.pattern.permute.xlu0 0
        %326 = vperm.xlu0 %325, %v323
        %v327 = vpop.permute.xlu0 %326
        %v329 = vmax.f32 %v327, %v258
        %v330 = vmax.f32 %v327, %v259
        %v331 = vmax.f32 %v327, %v260
        %333 = vset.pattern.permute.xlu0 0
        %334 = vperm.xlu0 %333, %v322
        %v335 = vpop.permute.xlu0 %334
        %v337 = vmin.f32 %v335, %v329
        %v338 = vmin.f32 %v335, %v330
        %v339 = vmin.f32 %v335, %v331
        %v340 = vsub.f32 %v258, %v337
        %v341 = vsub.f32 %v259, %v338
        %v342 = vsub.f32 %v260, %v339
        %343 = vst [vmem:[%s257] sm:$0xff] %v340
        %344 = vst [vmem:[%s257 + $0x8] sm:$0xff] %v341
        %345 = vst [vmem:[%s257 + $0x10] sm:$0xff] %v342
        %s346 = sand.u32 %s141, 1
        %s347 = scalar_lea.sflag [#allocation4], %s346
        %s348 = sand.u32 %s141, 1
        %s349 = smul.addr %s348, 24
        %s350 = scalar_lea.vmem [#allocation7], %s349
        // Predicated region
        $region49: #{tpu_custom_call.1} parent=39 // pred_check
          %p351 = pneg %p151
        $region50: #{tpu_custom_call.1} parent=39 // pred_check_branch
          %353 = sbr.rel (%p351) target = $region52
        $region51: #{tpu_custom_call.1} parent=39 // pred_region
          %355 = vsyncadd %s347, 0
          %s356 = smul.addr %s23, 3
          %s357 = smul.addr %s356, 8
          %s358 = scalar_lea.hbm %s5, %s357
          %s360 = sshll.u32 %s350, 4
          %s361 = int_to_ptr.vmem [resolvable:$true] %s360
          %s362 = sshll.u32 %s358, 4
          %s363 = int_to_ptr.hbm [resolvable:$true] %s362
          %365 = dma.vmem_to_hbm [thread:$0]  %s361, 384, %s363, %s347
        $region52: #{tpu_custom_call.1} parent=39 // pred_fallthru
          _
      $region40: #{tpu_custom_call.1} parent=5 // pred_fallthru
        _
      %p366 = scmp.le.s32.totalorder 2, %s18
      // Predicated region
      $region53: #{tpu_custom_call.1} parent=5 // pred_check
        %p367 = pneg %p366
      $region54: #{tpu_custom_call.1} parent=5 // pred_check_branch
        %369 = sbr.rel (%p367) target = $region56
      $region55: #{tpu_custom_call.1} parent=5 // pred_region
        %s370 = ssub.s32 %s18, 2
        // Predicated region
        $region57: #{tpu_custom_call.1} parent=55 // pred_check
          %p371 = pneg %p157
        $region58: #{tpu_custom_call.1} parent=55 // pred_check_branch
          %373 = sbr.rel (%p371) target = $region60
        $region59: #{tpu_custom_call.1} parent=55 // pred_region
          %s374 = sand.u32 %s142, 1
          %s375 = scalar_lea.sflag [#allocation4], %s374
          %s376 = sand.u32 %s142, 1
          %s377 = smul.addr %s376, 24
          %s378 = scalar_lea.vmem [#allocation7], %s377
          %380 = dma.done %s375, 384
        $region60: #{tpu_custom_call.1} parent=55 // pred_fallthru
          _
      $region56: #{tpu_custom_call.1} parent=5 // pred_fallthru
        _
    $region6: #{tpu_custom_call.1} parent=1 // loop_footer
      %s22 = sadd.s32 1, %s18
    $region7: #{tpu_custom_call.1} parent=1 // loop_footer_branch
      %17 = sbr.rel target = $region3
    $region8: #{tpu_custom_call.1} parent=1 // loop_exit
      _
    %381 = vsyncpa [#allocation3], 1
    %s382 = scalar_lea.sflag [#allocation3], 1
    %383 = vsyncpa %s382, 1
    %384 = vsyncpa [#allocation6], 1
    %385 = vsyncpa [#allocation4], 1
    %s386 = scalar_lea.sflag [#allocation4], 1
    %387 = vsyncpa %s386, 1

</llo_original>
